<compile_context>
chip_gen: v7x
topology: tpu7x:2x2x1
jax: 0.10.0
libtpu: 0.0.40
codegen_flags: <defaults>
</compile_context>

<pallas_src>
import functools

import jax
import jax.numpy as jnp
from jax.experimental import pallas as pl
from jax.experimental.pallas import tpu as pltpu


def _fast_glu_kernel(x_ref, wa_ref, wg_ref, ba_ref, bg_ref, o_ref,
                     acc_a_ref, acc_g_ref, *, activation):
    """Computes one (tm, tn) gated-output tile, accumulating over the K axis.

    x_ref  : (tm, tk)  input activations
    wa_ref : (tn, tk)  value-half weight tile (PyTorch layout: out x in)
    wg_ref : (tn, tk)  gate-half  weight tile
    ba_ref : (1, tn)   value-half bias tile
    bg_ref : (1, tn)   gate-half  bias tile
    o_ref  : (tm, tn)  output tile (lane-dense)
    acc_*  : (tm, tn)  f32 accumulators (VMEM scratch, persist across K steps)
    """
    k = pl.program_id(2)

    @pl.when(k == 0)
    def _init():
        acc_a_ref[...] = jnp.zeros_like(acc_a_ref)
        acc_g_ref[...] = jnp.zeros_like(acc_g_ref)

    x = x_ref[...]
    # Contract x's feature dim with the weight's `in_features` dim (its last
    # dim) -> no transpose of the PyTorch-layout weight is ever needed.
    dims = (((1,), (1,)), ((), ()))
    acc_a_ref[...] += jax.lax.dot_general(
        x, wa_ref[...], dims, preferred_element_type=jnp.float32)
    acc_g_ref[...] += jax.lax.dot_general(
        x, wg_ref[...], dims, preferred_element_type=jnp.float32)

    @pl.when(k == pl.num_programs(2) - 1)
    def _finalize():
        # Bias added exactly once; gating stays in f32 (EUP sigmoid is free
        # alongside the MXU), cast only on the final store.
        a = acc_a_ref[...] + ba_ref[...].astype(jnp.float32)
        g = acc_g_ref[...] + bg_ref[...].astype(jnp.float32)
        o_ref[...] = (a * activation(g)).astype(o_ref.dtype)


def _choose_tile(dim, target, quantum):
    """Largest multiple of `quantum` that divides `dim` and is <= target,
    else the full dim (so every grid step sees an exact, unmasked tile)."""
    if dim <= target:
        return dim
    t = (target // quantum) * quantum
    while t >= quantum:
        if dim % t == 0:
            return t
        t -= quantum
    return dim


def fast_glu(x, weight, bias, activation=jax.nn.sigmoid,
             *, tm=None, tn=None, tk=None):
    """x: (B, size); weight: (2*size, size) [PyTorch layout]; bias: (2*size,)."""
    B, size = x.shape
    assert weight.shape == (2 * size, size)
    assert bias.shape == (2 * size,)

    # Tile sizes: MXU/vreg-friendly, modest enough to fit v7x's smaller VMEM,
    # overridable per-generation (bigger tiles pay off on v6e).
    tm = tm if tm is not None else _choose_tile(B, 256, 8)
    tn = tn if tn is not None else _choose_tile(size, 256, 128)
    tk = tk if tk is not None else _choose_tile(size, 512, 128)
    assert B % tm == 0 and size % tn == 0 and size % tk == 0

    nb_gate = size // tn               # block offset of the gate half (dim 0)
    grid = (B // tm, size // tn, size // tk)

    b2d = bias.reshape(1, 2 * size)    # 2D for TPU layout (reshape is free)

    # index_maps (value half lives in blocks [0, nb_gate), gate half after it)
    x_map = lambda m, n, k: (m, k)
    wa_map = lambda m, n, k: (n, k)
    ba_map = lambda m, n, k: (0, n)
    out_map = lambda m, n, k: (m, n)

    def wg_map(m, n, k):
        return (n + nb_gate, k)

    def bg_map(m, n, k):
        return (0, n + nb_gate)

    # Rough double-buffered working-set estimate -> explicit scoped-VMEM limit
    # (kept <= 32 MiB so it is legal on every generation, incl. v7x).
    xsz = jnp.dtype(x.dtype).itemsize
    wsz = jnp.dtype(weight.dtype).itemsize
    est = (2 * tm * tk * xsz                 # x (double-buffered)
           + 2 * 2 * tn * tk * wsz           # value + gate weight tiles
           + 2 * 2 * tn * wsz                # bias tiles
           + 2 * tm * tn * xsz               # output tiles
           + 2 * tm * tn * 4)                # f32 accumulators
    vmem_limit = int(min(32 * 1024 * 1024, max(8 * 1024 * 1024, 2 * est)))

    kernel = functools.partial(_fast_glu_kernel, activation=activation)

    return pl.pallas_call(
        kernel,
        out_shape=jax.ShapeDtypeStruct((B, size), x.dtype),
        grid=grid,
        in_specs=[
            pl.BlockSpec((tm, tk), x_map),    # x
            pl.BlockSpec((tn, tk), wa_map),   # weight, value half
            pl.BlockSpec((tn, tk), wg_map),   # weight, gate half (same array)
            pl.BlockSpec((1, tn), ba_map),    # bias, value half
            pl.BlockSpec((1, tn), bg_map),    # bias, gate half (same array)
        ],
        out_specs=pl.BlockSpec((tm, tn), out_map),
        scratch_shapes=[
            pltpu.VMEM((tm, tn), jnp.float32),   # value accumulator
            pltpu.VMEM((tm, tn), jnp.float32),   # gate accumulator
        ],
        compiler_params=pltpu.CompilerParams(
            dimension_semantics=("parallel", "parallel", "arbitrary"),
            vmem_limit_bytes=vmem_limit,
        ),
    )(x, weight, weight, b2d, b2d)


if __name__ == "__main__":
    B, size = 16, 256

    key = jax.random.PRNGKey(0)
    kx, kw, kb = jax.random.split(key, 3)

    # Deterministic init mimicking nn.Linear default: U(-1/sqrt(size), 1/sqrt(size))
    bound = 1.0 / (size ** 0.5)
    x = jax.random.normal(kx, (B, size), dtype=jnp.float32)
    weight = jax.random.uniform(kw, (2 * size, size), jnp.float32, -bound, bound)
    bias = jax.random.uniform(kb, (2 * size,), jnp.float32, -bound, bound)

    activation = jax.nn.sigmoid  # the Callable passed to forward()

    # Pure-JAX reference
    y_ref = x @ weight.T + bias
    ref = y_ref[:, :size] * activation(y_ref[:, size:])

    # 1) Explicit small tiles -> exercises the full (M, N, K) = (2, 2, 2) grid
    #    with K-axis accumulation and gate-half block offsets.
    out = fast_glu(x, weight, bias, activation, tm=8, tn=128, tk=128)
    jax.block_until_ready(out)
    assert out.shape == (B, size)
    assert jnp.allclose(out, ref, atol=1e-5, rtol=1e-5), "mismatch (tiled grid)"

    # 2) Auto-chosen tiles (single-step grid at this small size).
    out2 = fast_glu(x, weight, bias, activation)
    jax.block_until_ready(out2)
    assert jnp.allclose(out2, ref, atol=1e-5, rtol=1e-5), "mismatch (auto tiles)"

    print("KERNEL_OK")
</pallas_src>

<mosaic_0001>
module attributes {stable_mosaic.version = 11 : i64} {
  func.func @_fast_glu_kernel(%arg0: i32, %arg1: i32, %arg2: i32, %arg3: memref<8x128xf32, #tpu.memory_space<vmem>>, %arg4: memref<128x128xf32, #tpu.memory_space<vmem>>, %arg5: memref<128x128xf32, #tpu.memory_space<vmem>>, %arg6: memref<1x128xf32, #tpu.memory_space<vmem>>, %arg7: memref<1x128xf32, #tpu.memory_space<vmem>>, %arg8: memref<8x128xf32, #tpu.memory_space<vmem>>, %arg9: memref<8x128xf32, #tpu.memory_space<vmem>>, %arg10: memref<8x128xf32, #tpu.memory_space<vmem>>) attributes {dimension_semantics = [#tpu.dimension_semantics<parallel>, #tpu.dimension_semantics<parallel>, #tpu.dimension_semantics<arbitrary>], iteration_bounds = array<i64: 2, 2, 2>, scalar_prefetch = 0 : i64, scratch_operands = 2 : i64, tpu.core_type = #tpu.core_type<tc>, window_params = [{transform_indices = @transform_0, window_bounds = array<i64: 8, 128>}, {transform_indices = @transform_1, window_bounds = array<i64: 128, 128>}, {transform_indices = @transform_2, window_bounds = array<i64: 128, 128>}, {transform_indices = @transform_3, window_bounds = array<i64: 1, 128>}, {transform_indices = @transform_4, window_bounds = array<i64: 1, 128>}, {transform_indices = @transform_5, window_bounds = array<i64: 8, 128>}]} {
    %c0_i32 = arith.constant 0 : i32
    %0 = arith.cmpi eq, %arg2, %c0_i32 : i32
    %1 = arith.extui %0 : i1 to i32
    %c0_i32_0 = arith.constant 0 : i32
    %2 = arith.cmpi ne, %1, %c0_i32_0 : i32
    scf.if %2 {
      %cst_16 = arith.constant 0.000000e+00 : f32
      %17 = vector.broadcast %cst_16 : f32 to vector<8x128xf32>
      %c0_17 = arith.constant 0 : index
      %c0_18 = arith.constant 0 : index
      %18 = vector.load %arg9[%c0_17, %c0_18] : memref<8x128xf32, #tpu.memory_space<vmem>>, vector<8x128xf32>
      tpu.vector_store %arg9[%c0_17, %c0_18], %17 {strides = array<i32>} : memref<8x128xf32, #tpu.memory_space<vmem>>, vector<8x128xf32>,
      %cst_19 = arith.constant 0.000000e+00 : f32
      %19 = vector.broadcast %cst_19 : f32 to vector<8x128xf32>
      %c0_20 = arith.constant 0 : index
      %c0_21 = arith.constant 0 : index
      %20 = vector.load %arg10[%c0_20, %c0_21] : memref<8x128xf32, #tpu.memory_space<vmem>>, vector<8x128xf32>
      tpu.vector_store %arg10[%c0_20, %c0_21], %19 {strides = array<i32>} : memref<8x128xf32, #tpu.memory_space<vmem>>, vector<8x128xf32>,
    } else {
    }
    %c0 = arith.constant 0 : index
    %c0_1 = arith.constant 0 : index
    %3 = vector.load %arg3[%c0, %c0_1] : memref<8x128xf32, #tpu.memory_space<vmem>>, vector<8x128xf32>
    %c0_2 = arith.constant 0 : index
    %c0_3 = arith.constant 0 : index
    %4 = vector.load %arg9[%c0_2, %c0_3] : memref<8x128xf32, #tpu.memory_space<vmem>>, vector<8x128xf32>
    %c0_4 = arith.constant 0 : index
    %c0_5 = arith.constant 0 : index
    %5 = vector.load %arg4[%c0_4, %c0_5] : memref<128x128xf32, #tpu.memory_space<vmem>>, vector<128x128xf32>
    %cst = arith.constant dense<0.000000e+00> : vector<8x128xf32>
    %6 = tpu.matmul %3, %5, %cst {dimension_numbers = #tpu.dot_dimension_numbers<[1], [1], [0], [0], [0, 0, 1, 0], [], []>} : vector<8x128xf32>, vector<128x128xf32>, vector<8x128xf32> -> vector<8x128xf32>
    %7 = arith.addf %4, %6 : vector<8x128xf32>
    %c0_6 = arith.constant 0 : index
    %c0_7 = arith.constant 0 : index
    %8 = vector.load %arg9[%c0_6, %c0_7] : memref<8x128xf32, #tpu.memory_space<vmem>>, vector<8x128xf32>
    tpu.vector_store %arg9[%c0_6, %c0_7], %7 {strides = array<i32>} : memref<8x128xf32, #tpu.memory_space<vmem>>, vector<8x128xf32>,
    %c0_8 = arith.constant 0 : index
    %c0_9 = arith.constant 0 : index
    %9 = vector.load %arg10[%c0_8, %c0_9] : memref<8x128xf32, #tpu.memory_space<vmem>>, vector<8x128xf32>
    %c0_10 = arith.constant 0 : index
    %c0_11 = arith.constant 0 : index
    %10 = vector.load %arg5[%c0_10, %c0_11] : memref<128x128xf32, #tpu.memory_space<vmem>>, vector<128x128xf32>
    %cst_12 = arith.constant dense<0.000000e+00> : vector<8x128xf32>
    %11 = tpu.matmul %3, %10, %cst_12 {dimension_numbers = #tpu.dot_dimension_numbers<[1], [1], [0], [0], [0, 0, 1, 0], [], []>} : vector<8x128xf32>, vector<128x128xf32>, vector<8x128xf32> -> vector<8x128xf32>
    %12 = arith.addf %9, %11 : vector<8x128xf32>
    %c0_13 = arith.constant 0 : index
    %c0_14 = arith.constant 0 : index
    %13 = vector.load %arg10[%c0_13, %c0_14] : memref<8x128xf32, #tpu.memory_space<vmem>>, vector<8x128xf32>
    tpu.vector_store %arg10[%c0_13, %c0_14], %12 {strides = array<i32>} : memref<8x128xf32, #tpu.memory_space<vmem>>, vector<8x128xf32>,
    %c1_i32 = arith.constant 1 : i32
    %14 = arith.cmpi eq, %arg2, %c1_i32 : i32
    %15 = arith.extui %14 : i1 to i32
    %c0_i32_15 = arith.constant 0 : i32
    %16 = arith.cmpi ne, %15, %c0_i32_15 : i32
    scf.if %16 {
      %c0_16 = arith.constant 0 : index
      %c0_17 = arith.constant 0 : index
      %17 = vector.load %arg9[%c0_16, %c0_17] : memref<8x128xf32, #tpu.memory_space<vmem>>, vector<8x128xf32>
      %c0_18 = arith.constant 0 : index
      %c0_19 = arith.constant 0 : index
      %18 = vector.load %arg6[%c0_18, %c0_19] : memref<1x128xf32, #tpu.memory_space<vmem>>, vector<1x128xf32>
      %19 = vector.broadcast %18 : vector<1x128xf32> to vector<8x128xf32>
      %20 = arith.addf %17, %19 : vector<8x128xf32>
      %c0_20 = arith.constant 0 : index
      %c0_21 = arith.constant 0 : index
      %21 = vector.load %arg10[%c0_20, %c0_21] : memref<8x128xf32, #tpu.memory_space<vmem>>, vector<8x128xf32>
      %c0_22 = arith.constant 0 : index
      %c0_23 = arith.constant 0 : index
      %22 = vector.load %arg7[%c0_22, %c0_23] : memref<1x128xf32, #tpu.memory_space<vmem>>, vector<1x128xf32>
      %23 = vector.broadcast %22 : vector<1x128xf32> to vector<8x128xf32>
      %24 = arith.addf %21, %23 : vector<8x128xf32>
      %25 = arith.negf %24 : vector<8x128xf32>
      %26 = math.exp %25 : vector<8x128xf32>
      %cst_24 = arith.constant 1.000000e+00 : f32
      %27 = vector.broadcast %cst_24 : f32 to vector<8x128xf32>
      %28 = arith.addf %27, %26 : vector<8x128xf32>
      %29 = arith.divf %27, %28 : vector<8x128xf32>
      %30 = arith.mulf %20, %29 : vector<8x128xf32>
      %c0_25 = arith.constant 0 : index
      %c0_26 = arith.constant 0 : index
      %31 = vector.load %arg8[%c0_25, %c0_26] : memref<8x128xf32, #tpu.memory_space<vmem>>, vector<8x128xf32>
      tpu.vector_store %arg8[%c0_25, %c0_26], %30 {strides = array<i32>} : memref<8x128xf32, #tpu.memory_space<vmem>>, vector<8x128xf32>,
    } else {
    }
    return
  }
  func.func @transform_0(%arg0: i32, %arg1: i32, %arg2: i32) -> (i32, i32) {
    %c0_i32 = arith.constant 0 : i32
    return %arg0, %arg2 : i32, i32
  }
  func.func @transform_1(%arg0: i32, %arg1: i32, %arg2: i32) -> (i32, i32) {
    %c0_i32 = arith.constant 0 : i32
    return %arg1, %arg2 : i32, i32
  }
  func.func @transform_2(%arg0: i32, %arg1: i32, %arg2: i32) -> (i32, i32) {
    %c2_i32 = arith.constant 2 : i32
    %0 = arith.addi %arg1, %c2_i32 : i32
    %c0_i32 = arith.constant 0 : i32
    return %0, %arg2 : i32, i32
  }
  func.func @transform_3(%arg0: i32, %arg1: i32, %arg2: i32) -> (i32, i32) {
    %c0_i32 = arith.constant 0 : i32
    %c0_i32_0 = arith.constant 0 : i32
    return %c0_i32, %arg1 : i32, i32
  }
  func.func @transform_4(%arg0: i32, %arg1: i32, %arg2: i32) -> (i32, i32) {
    %c2_i32 = arith.constant 2 : i32
    %0 = arith.addi %arg1, %c2_i32 : i32
    %c0_i32 = arith.constant 0 : i32
    %c0_i32_0 = arith.constant 0 : i32
    return %c0_i32, %0 : i32, i32
  }
  func.func @transform_5(%arg0: i32, %arg1: i32, %arg2: i32) -> (i32, i32) {
    %c0_i32 = arith.constant 0 : i32
    return %arg0, %arg1 : i32, i32
  }
}

</mosaic_0001>

<llo_original>
// kernel: tpu_custom_call.1
$region0: #{tpu_custom_call.1}
  #allocation0 [shape = 'u32[]', space=smem, size = 0x4, offset = 0x4, fixed_abs, tag = 'smem constant byte address 0x4 - core index']
  #allocation1 [shape = 'u32[144,128]{1,0:T(1,128)}', space=vmem, size = 0x12000, scoped, tag = 'internal scratch']
  #allocation2 [shape = 'f32[8,128]{1,0:T(8,128)}', space=vmem, size = 0x1000, scoped, tag = 'scratch operand']
  #allocation3 [shape = 'f32[8,128]{1,0:T(8,128)}', space=vmem, size = 0x1000, scoped, tag = 'scratch operand']
  %s0 = inlined_call_operand.hbm [shape: f32[16,256], index: 0, kind: input, shape index: {}]
  %s1 = inlined_call_operand.hbm [shape: f32[512,256], index: 1, kind: input, shape index: {}]
  %s2 = inlined_call_operand.hbm [shape: f32[512,256], index: 2, kind: input, shape index: {}]
  %s3 = inlined_call_operand.vmem [shape: f32[1,512], index: 3, kind: input, shape index: {}]
  %s4 = inlined_call_operand.vmem [shape: f32[1,512], index: 4, kind: input, shape index: {}]
  %s5 = inlined_call_operand.hbm [shape: f32[16,256], index: 5, kind: output, shape index: {}]
  %s6 = sld [smem:[#allocation0]]
  $region73: #{tpu_custom_call.1} parent=0
    _
  %s8 = ssub.s32 1, %s6
  %s9 = scalar_select 0, %s8, %s6
  $region1: #{tpu_custom_call.1} parent=0
    #allocation4 [shape = 'u8[8192]{0}', space=vmem, size = 0x2000, scoped, tag = 'input window, operand 0']
    #allocation5 [shape = 's32[2]{0}', space=sflag, size = 0x8, scoped, tag = 'scoped memory for tpu_custom_call.1']
    #allocation6 [shape = 's32[2]{0}', space=sflag, size = 0x8, scoped, tag = 'scoped memory for tpu_custom_call.1']
    #allocation7 [shape = 'u8[131072]{0}', space=vmem, size = 0x20000, scoped, tag = 'input window, operand 1']
    #allocation8 [shape = 's32[2]{0}', space=sflag, size = 0x8, scoped, tag = 'scoped memory for tpu_custom_call.1']
    #allocation9 [shape = 'u8[131072]{0}', space=vmem, size = 0x20000, scoped, tag = 'input window, operand 2']
    #allocation10 [shape = 'u8[8192]{0}', space=vmem, size = 0x2000, scoped, tag = 'output window, operand 0']
    %10 = vsyncpa [#allocation5], 0
    %s11 = scalar_lea.sflag [#allocation5], 1
    %12 = vsyncpa %s11, 0
    %13 = vsyncpa [#allocation8], 0
    %s14 = scalar_lea.sflag [#allocation8], 1
    %15 = vsyncpa %s14, 0
    %16 = vsyncpa [#allocation6], 0
    %s17 = scalar_lea.sflag [#allocation6], 1
    %18 = vsyncpa %s17, 0
    loop: start=0, step=1, limit=10
    $region2: #{tpu_custom_call.1} parent=1 // loop_pre_header
      _
    $region3: #{tpu_custom_call.1} parent=1 // loop_header
      %s20 = sphi 0, %s24
      %p21 = scmp.ge.s32.totalorder %s20, 10
      %s27 = sphi 0, %s46
      %s28 = sphi 0, %s42
      %s29 = sphi 0, %s38
      %s30 = sphi 0, %s27
      %s31 = sphi 0, %s28
      %s32 = sphi 0, %s29
      %s33 = sphi 0, %s30
      %s34 = sphi 0, %s31
      %s35 = sphi 0, %s32
      %s51 = sphi 0, %s53
      %s54 = sphi 0, %s51
      %s55 = sphi 0, %s54
      %s71 = sphi 0, %s55
      %s79 = sphi 0, %s81
      %s82 = sphi 0, %s79
      %s83 = sphi 0, %s82
      %s99 = sphi 0, %s83
      %s109 = sphi 0, %s111
      %s112 = sphi 0, %s109
      %s113 = sphi 0, %s112
      %s129 = sphi 0, %s113
      %s135 = sphi 0, %s137
      %s138 = sphi 0, %s135
      %s139 = sphi 0, %s138
      %s155 = sphi 0, %s139
      %s163 = sphi 0, %s165
      %s166 = sphi 0, %s163
      %s167 = sphi 0, %s166
      %s183 = sphi 0, %s167
      %s191 = sphi 0, %s193
      %s194 = sphi 0, %s191
      %s195 = sphi 0, %s194
      %s211 = sphi 0, %s195
    $region4: #{tpu_custom_call.1} parent=1 // loop_header_branch
      %23 = sbr.rel (%p21) target = $region8
    $region5: #{tpu_custom_call.1} parent=1 // loop_body
      %s25 = ssub.s32 %s20, 1
      %s26 = ssub.s32 %s20, 2
      %s36 = sadd.s32 1, %s29
      %p37 = scmp.ge.s32.totalorder %s36, 2
      %s38 = scalar_select %p37, 0, %s36
      %s39 = sadd.s32 1, %s28
      %s40 = scalar_select %p37, %s39, %s28
      %p41 = scmp.ge.s32.totalorder %s40, 2
      %s42 = scalar_select %p41, 0, %s40
      %s43 = sadd.s32 1, %s27
      %s44 = scalar_select %p41, %s43, %s27
      %p45 = scmp.ge.s32.totalorder %s44, 2
      %s46 = scalar_select %p45, 0, %s44
      %s47 = ssub.s32 %s27, %s46
      %s48 = ssub.s32 %s29, %s38
      %s49 = sor.u32 %s47, %s48
      %p50 = scmp.eq.s32.totalorder %s49, 0
      %s52 = sadd.s32 %s51, 1
      %s53 = scalar_select %p50, %s51, %s52
      %p56 = pneg %p50
      %p57 = scmp.eq.s32.totalorder %s20, 7
      %p58 = por %p56, %p57
      %p59 = scmp.ne.s32.totalorder %s51, %s54
      %p60 = scmp.eq.s32.totalorder %s20, 0
      %p61 = por %p59, %p60
      %p62 = scmp.ne.s32.totalorder %s51, %s54
      %p63 = scmp.eq.s32.totalorder %s25, 7
      %p64 = por %p62, %p63
      %p65 = scmp.ne.s32.totalorder %s54, %s55
      %p66 = scmp.eq.s32.totalorder %s25, 0
      %p67 = por %p65, %p66
      %p68 = scmp.ne.s32.totalorder %s54, %s55
      %p69 = scmp.eq.s32.totalorder %s26, 7
      %p70 = por %p68, %p69
      %p72 = scmp.ne.s32.totalorder %s55, %s71
      %p73 = scmp.eq.s32.totalorder %s26, 0
      %p74 = por %p72, %p73
      %s75 = ssub.s32 %s28, %s42
      %s76 = ssub.s32 %s29, %s38
      %s77 = sor.u32 %s75, %s76
      %p78 = scmp.eq.s32.totalorder %s77, 0
      %s80 = sadd.s32 %s79, 1
      %s81 = scalar_select %p78, %s79, %s80
      %p84 = pneg %p78
      %p85 = scmp.eq.s32.totalorder %s20, 7
      %p86 = por %p84, %p85
      %p87 = scmp.ne.s32.totalorder %s79, %s82
      %p88 = scmp.eq.s32.totalorder %s20, 0
      %p89 = por %p87, %p88
      %p90 = scmp.ne.s32.totalorder %s79, %s82
      %p91 = scmp.eq.s32.totalorder %s25, 7
      %p92 = por %p90, %p91
      %p93 = scmp.ne.s32.totalorder %s82, %s83
      %p94 = scmp.eq.s32.totalorder %s25, 0
      %p95 = por %p93, %p94
      %p96 = scmp.ne.s32.totalorder %s82, %s83
      %p97 = scmp.eq.s32.totalorder %s26, 7
      %p98 = por %p96, %p97
      %p100 = scmp.ne.s32.totalorder %s83, %s99
      %p101 = scmp.eq.s32.totalorder %s26, 0
      %p102 = por %p100, %p101
      %s103 = sadd.s32 %s28, 2
      %s104 = sadd.s32 %s42, 2
      %s105 = ssub.s32 %s103, %s104
      %s106 = ssub.s32 %s29, %s38
      %s107 = sor.u32 %s105, %s106
      %p108 = scmp.eq.s32.totalorder %s107, 0
      %s110 = sadd.s32 %s109, 1
      %s111 = scalar_select %p108, %s109, %s110
      %p114 = pneg %p108
      %p115 = scmp.eq.s32.totalorder %s20, 7
      %p116 = por %p114, %p115
      %p117 = scmp.ne.s32.totalorder %s109, %s112
      %p118 = scmp.eq.s32.totalorder %s20, 0
      %p119 = por %p117, %p118
      %p120 = scmp.ne.s32.totalorder %s109, %s112
      %p121 = scmp.eq.s32.totalorder %s25, 7
      %p122 = por %p120, %p121
      %p123 = scmp.ne.s32.totalorder %s112, %s113
      %p124 = scmp.eq.s32.totalorder %s25, 0
      %p125 = por %p123, %p124
      %p126 = scmp.ne.s32.totalorder %s112, %s113
      %p127 = scmp.eq.s32.totalorder %s26, 7
      %p128 = por %p126, %p127
      %p130 = scmp.ne.s32.totalorder %s113, %s129
      %p131 = scmp.eq.s32.totalorder %s26, 0
      %p132 = por %p130, %p131
      %s133 = ssub.s32 %s28, %s42
      %p134 = scmp.eq.s32.totalorder %s133, 0
      %s136 = sadd.s32 %s135, 1
      %s137 = scalar_select %p134, %s135, %s136
      %p140 = pneg %p134
      %p141 = scmp.eq.s32.totalorder %s20, 7
      %p142 = por %p140, %p141
      %p143 = scmp.ne.s32.totalorder %s135, %s138
      %p144 = scmp.eq.s32.totalorder %s20, 0
      %p145 = por %p143, %p144
      %p146 = scmp.ne.s32.totalorder %s135, %s138
      %p147 = scmp.eq.s32.totalorder %s25, 7
      %p148 = por %p146, %p147
      %p149 = scmp.ne.s32.totalorder %s138, %s139
      %p150 = scmp.eq.s32.totalorder %s25, 0
      %p151 = por %p149, %p150
      %p152 = scmp.ne.s32.totalorder %s138, %s139
      %p153 = scmp.eq.s32.totalorder %s26, 7
      %p154 = por %p152, %p153
      %p156 = scmp.ne.s32.totalorder %s139, %s155
      %p157 = scmp.eq.s32.totalorder %s26, 0
      %p158 = por %p156, %p157
      %s159 = sadd.s32 %s28, 2
      %s160 = sadd.s32 %s42, 2
      %s161 = ssub.s32 %s159, %s160
      %p162 = scmp.eq.s32.totalorder %s161, 0
      %s164 = sadd.s32 %s163, 1
      %s165 = scalar_select %p162, %s163, %s164
      %p168 = pneg %p162
      %p169 = scmp.eq.s32.totalorder %s20, 7
      %p170 = por %p168, %p169
      %p171 = scmp.ne.s32.totalorder %s163, %s166
      %p172 = scmp.eq.s32.totalorder %s20, 0
      %p173 = por %p171, %p172
      %p174 = scmp.ne.s32.totalorder %s163, %s166
      %p175 = scmp.eq.s32.totalorder %s25, 7
      %p176 = por %p174, %p175
      %p177 = scmp.ne.s32.totalorder %s166, %s167
      %p178 = scmp.eq.s32.totalorder %s25, 0
      %p179 = por %p177, %p178
      %p180 = scmp.ne.s32.totalorder %s166, %s167
      %p181 = scmp.eq.s32.totalorder %s26, 7
      %p182 = por %p180, %p181
      %p184 = scmp.ne.s32.totalorder %s167, %s183
      %p185 = scmp.eq.s32.totalorder %s26, 0
      %p186 = por %p184, %p185
      %s187 = ssub.s32 %s27, %s46
      %s188 = ssub.s32 %s28, %s42
      %s189 = sor.u32 %s187, %s188
      %p190 = scmp.eq.s32.totalorder %s189, 0
      %s192 = sadd.s32 %s191, 1
      %s193 = scalar_select %p190, %s191, %s192
      %p196 = pneg %p190
      %p197 = scmp.eq.s32.totalorder %s20, 7
      %p198 = por %p196, %p197
      %p199 = scmp.ne.s32.totalorder %s191, %s194
      %p200 = scmp.eq.s32.totalorder %s20, 0
      %p201 = por %p199, %p200
      %p202 = scmp.ne.s32.totalorder %s191, %s194
      %p203 = scmp.eq.s32.totalorder %s25, 7
      %p204 = por %p202, %p203
      %p205 = scmp.ne.s32.totalorder %s194, %s195
      %p206 = scmp.eq.s32.totalorder %s25, 0
      %p207 = por %p205, %p206
      %p208 = scmp.ne.s32.totalorder %s194, %s195
      %p209 = scmp.eq.s32.totalorder %s26, 7
      %p210 = por %p208, %p209
      %p212 = scmp.ne.s32.totalorder %s195, %s211
      %p213 = scmp.eq.s32.totalorder %s26, 0
      %p214 = por %p212, %p213
      %p215 = scmp.le.s32.totalorder 1, %s20
      %p216 = scmp.lt.s32.totalorder %s20, 9
      %p217 = pnand %p215, %p216
      %p218 = pneg %p217
      // Predicated region
      $region9: #{tpu_custom_call.1} parent=5 // pred_check
        _
      $region10: #{tpu_custom_call.1} parent=5 // pred_check_branch
        %220 = sbr.rel (%p217) target = $region12
      $region11: #{tpu_custom_call.1} parent=5 // pred_region
        %s221 = ssub.s32 %s20, 1
      $region12: #{tpu_custom_call.1} parent=5 // pred_fallthru
        _
      %p222 = scmp.lt.s32.totalorder %s20, 8
      // Predicated region
      $region13: #{tpu_custom_call.1} parent=5 // pred_check
        %p223 = pneg %p222
      $region14: #{tpu_custom_call.1} parent=5 // pred_check_branch
        %225 = sbr.rel (%p223) target = $region16
      $region15: #{tpu_custom_call.1} parent=5 // pred_region
        // Predicated region
        $region17: #{tpu_custom_call.1} parent=15 // pred_check
          %p226 = pneg %p61
        $region18: #{tpu_custom_call.1} parent=15 // pred_check_branch
          %228 = sbr.rel (%p226) target = $region20
        $region19: #{tpu_custom_call.1} parent=15 // pred_region
          %s229 = sand.u32 %s51, 1
          %s230 = scalar_lea.sflag [#allocation5], %s229
          %s231 = sand.u32 %s51, 1
          %s232 = smul.addr %s231, 8
          %s233 = scalar_lea.vmem [#allocation4], %s232
          %s235 = ssub.s32 128, 128
          %236 = vsyncadd %s230, %s235
          %s237 = smul.addr %s27, 2
          %s238 = sadd.s32 %s29, %s237
          %s239 = smul.addr %s238, 128
          %s240 = scalar_lea.hbm %s0, %s239
          %s242 = sshll.u32 %s233, 4
          %s243 = int_to_ptr.vmem [resolvable:$true] %s242
          %245 = dma.hbm_to_vmem [thread:$0]  %s240, 128, %s243, %s230
        $region20: #{tpu_custom_call.1} parent=15 // pred_fallthru
          _
        // Predicated region
        $region21: #{tpu_custom_call.1} parent=15 // pred_check
          %p246 = pneg %p89
        $region22: #{tpu_custom_call.1} parent=15 // pred_check_branch
          %248 = sbr.rel (%p246) target = $region24
        $region23: #{tpu_custom_call.1} parent=15 // pred_region
          %s249 = sand.u32 %s20, 1
          %s250 = scalar_lea.sflag [#allocation8], %s249
          %s251 = sand.u32 %s79, 1
          %s252 = smul.addr %s251, 128
          %s253 = scalar_lea.vmem [#allocation7], %s252
          %s254 = smul.u32 16, %s28
          %s256 = ssub.s32 2048, 2048
          %257 = vsyncadd %s250, %s256
          %s258 = smul.addr %s254, 2
          %s259 = sadd.s32 %s29, %s258
          %s260 = smul.addr %s259, 128
          %s261 = scalar_lea.hbm %s1, %s260
          %s262 = sshll.u32 %s253, 4
          %s263 = int_to_ptr.vmem [resolvable:$true] %s262
          %268 = dma.hbm_to_vmem [thread:$0]  %s261, 2048, %s263, %s250, 256, 128, 8
        $region24: #{tpu_custom_call.1} parent=15 // pred_fallthru
          _
        // Predicated region
        $region25: #{tpu_custom_call.1} parent=15 // pred_check
          %p269 = pneg %p119
        $region26: #{tpu_custom_call.1} parent=15 // pred_check_branch
          %271 = sbr.rel (%p269) target = $region28
        $region27: #{tpu_custom_call.1} parent=15 // pred_region
          %s272 = sand.u32 %s20, 1
          %s273 = scalar_lea.sflag [#allocation8], %s272
          %s274 = sand.u32 %s109, 1
          %s275 = smul.addr %s274, 128
          %s276 = scalar_lea.vmem [#allocation9], %s275
          %s277 = sadd.s32 %s28, 2
          %s278 = smul.u32 16, %s277
          %s280 = ssub.s32 2048, 2048
          %281 = vsyncadd %s273, %s280
          %s282 = smul.addr %s278, 2
          %s283 = sadd.s32 %s29, %s282
          %s284 = smul.addr %s283, 128
          %s285 = scalar_lea.hbm %s2, %s284
          %s286 = sshll.u32 %s276, 4
          %s287 = int_to_ptr.vmem [resolvable:$true] %s286
          %292 = dma.hbm_to_vmem [thread:$0]  %s285, 2048, %s287, %s273, 256, 128, 8
        $region28: #{tpu_custom_call.1} parent=15 // pred_fallthru
          _
        // Predicated region
        $region29: #{tpu_custom_call.1} parent=15 // pred_check
          %p293 = pneg %p145
        $region30: #{tpu_custom_call.1} parent=15 // pred_check_branch
          %295 = sbr.rel (%p293) target = $region32
        $region31: #{tpu_custom_call.1} parent=15 // pred_region
          %p296 = scmp.lt.s32.totalorder %s28, 3
          %s297 = scalar_select %p296, %s28, 3
          %s298 = scalar_lea.vmem %s3, %s297
        $region32: #{tpu_custom_call.1} parent=15 // pred_fallthru
          _
        // Predicated region
        $region33: #{tpu_custom_call.1} parent=15 // pred_check
          %p299 = pneg %p173
        $region34: #{tpu_custom_call.1} parent=15 // pred_check_branch
          %301 = sbr.rel (%p299) target = $region36
        $region35: #{tpu_custom_call.1} parent=15 // pred_region
          %s302 = sadd.s32 %s28, 2
          %p303 = scmp.lt.s32.totalorder %s302, 3
          %s304 = scalar_select %p303, %s302, 3
          %s305 = scalar_lea.vmem %s4, %s304
          %s306 = sadd.s32 %s28, 2
        $region36: #{tpu_custom_call.1} parent=15 // pred_fallthru
          _
      $region16: #{tpu_custom_call.1} parent=5 // pred_fallthru
        _
      %p307 = scmp.le.s32.totalorder 1, %s20
      %p308 = scmp.lt.s32.totalorder %s20, 9
      %p309 = pnand %p307, %p308
      %p310 = pneg %p309
      // Predicated region
      $region37: #{tpu_custom_call.1} parent=5 // pred_check
        _
      $region38: #{tpu_custom_call.1} parent=5 // pred_check_branch
        %312 = sbr.rel (%p309) target = $region40
      $region39: #{tpu_custom_call.1} parent=5 // pred_region
        %s313 = ssub.s32 %s20, 1
        %s314 = sand.u32 %s54, 1
        %s315 = scalar_lea.sflag [#allocation5], %s314
        %s316 = sand.u32 %s54, 1
        %s317 = smul.addr %s316, 8
        %s318 = scalar_lea.vmem [#allocation4], %s317
        // Predicated region
        $region41: #{tpu_custom_call.1} parent=39 // pred_check
          %p319 = pneg %p67
        $region42: #{tpu_custom_call.1} parent=39 // pred_check_branch
          %321 = sbr.rel (%p319) target = $region44
        $region43: #{tpu_custom_call.1} parent=39 // pred_region
          %322 = dma.done %s315, 128
        $region44: #{tpu_custom_call.1} parent=39 // pred_fallthru
          _
        %s323 = sand.u32 %s25, 1
        %s324 = scalar_lea.sflag [#allocation8], %s323
        %s325 = sand.u32 %s82, 1
        %s326 = smul.addr %s325, 128
        %s327 = scalar_lea.vmem [#allocation7], %s326
        // Predicated region
        $region45: #{tpu_custom_call.1} parent=39 // pred_check
          %p328 = pneg %p95
        $region46: #{tpu_custom_call.1} parent=39 // pred_check_branch
          %330 = sbr.rel (%p328) target = $region48
        $region47: #{tpu_custom_call.1} parent=39 // pred_region
          %331 = dma.done %s324, 2048
        $region48: #{tpu_custom_call.1} parent=39 // pred_fallthru
          _
        %s332 = sand.u32 %s25, 1
        %s333 = scalar_lea.sflag [#allocation8], %s332
        %s334 = sand.u32 %s112, 1
        %s335 = smul.addr %s334, 128
        %s336 = scalar_lea.vmem [#allocation9], %s335
        // Predicated region
        $region49: #{tpu_custom_call.1} parent=39 // pred_check
          %p337 = pneg %p125
        $region50: #{tpu_custom_call.1} parent=39 // pred_check_branch
          %339 = sbr.rel (%p337) target = $region52
        $region51: #{tpu_custom_call.1} parent=39 // pred_region
          %340 = dma.done %s333, 2048
        $region52: #{tpu_custom_call.1} parent=39 // pred_fallthru
          _
        %s341 = sand.u32 %s54, 1
        %s342 = scalar_lea.sflag [#allocation5], %s341
        %s343 = sand.u32 %s54, 1
        %s344 = smul.addr %s343, 8
        %s345 = scalar_lea.vmem [#allocation4], %s344
        %p346 = pneg %p67
        %p347 = pneg %p64
        %s348 = sand.u32 %s25, 1
        %s349 = scalar_lea.sflag [#allocation8], %s348
        %s350 = sand.u32 %s82, 1
        %s351 = smul.addr %s350, 128
        %s352 = scalar_lea.vmem [#allocation7], %s351
        %p353 = pneg %p95
        %p354 = pneg %p92
        %s355 = sand.u32 %s25, 1
        %s356 = scalar_lea.sflag [#allocation8], %s355
        %s357 = sand.u32 %s112, 1
        %s358 = smul.addr %s357, 128
        %s359 = scalar_lea.vmem [#allocation9], %s358
        %p360 = pneg %p125
        %p361 = pneg %p122
        %p362 = scmp.lt.s32.totalorder %s31, 3
        %s363 = scalar_select %p362, %s31, 3
        %s364 = scalar_lea.vmem %s3, %s363
        %p365 = pneg %p151
        %p366 = pneg %p148
        %s367 = sadd.s32 %s31, 2
        %p368 = scmp.lt.s32.totalorder %s367, 3
        %s369 = scalar_select %p368, %s367, 3
        %s370 = scalar_lea.vmem %s4, %s369
        %p371 = pneg %p179
        %p372 = pneg %p176
        %p373 = pneg %p207
        %p374 = pneg %p204
        %s375 = sand.u32 %s194, 1
        %s376 = scalar_lea.sflag [#allocation6], %s375
        %s377 = sand.u32 %s194, 1
        %s378 = smul.addr %s377, 8
        %s379 = scalar_lea.vmem [#allocation10], %s378
        %s380 = smul.u32 16, %s31
        %s381 = sadd.s32 %s31, 2
        %s382 = smul.u32 16, %s381
        %p383 = scmp.lt.s32.totalorder %s31, 3
        %s384 = scalar_select %p383, %s31, 3
        %s385 = scalar_lea.vmem %s3, %s384
        %s386 = sadd.s32 %s31, 2
        %p387 = scmp.lt.s32.totalorder %s386, 3
        %s388 = scalar_select %p387, %s386, 3
        %s389 = scalar_lea.vmem %s4, %s388
        %s390 = sadd.s32 %s31, 2
        %p391 = scmp.eq.s32.totalorder %s32, 0
        // Predicated region
        $region53: #{tpu_custom_call.1} parent=39 // pred_check
          %p392 = pneg %p391
        $region54: #{tpu_custom_call.1} parent=39 // pred_check_branch
          %394 = sbr.rel (%p392) target = $region56
        $region55: #{tpu_custom_call.1} parent=39 // pred_region
          %395 = vst [vmem:[#allocation2] sm:$0xff] 0.0
          %396 = vst [vmem:[#allocation3] sm:$0xff] 0.0
        $region56: #{tpu_custom_call.1} parent=39 // pred_fallthru
          _
        %v397 = vld [vmem:[%s318] sm:$0xff]
        %v398 = vld [vmem:[#allocation2] sm:$0xff]
        %v399 = vld [vmem:[%s327] sm:$0xff]
        %v400 = vld [vmem:[%s327 + $0x8] sm:$0xff]
        %v401 = vld [vmem:[%s327 + $0x10] sm:$0xff]
        %v402 = vld [vmem:[%s327 + $0x18] sm:$0xff]
        %v403 = vld [vmem:[%s327 + $0x20] sm:$0xff]
        %v404 = vld [vmem:[%s327 + $0x28] sm:$0xff]
        %v405 = vld [vmem:[%s327 + $0x30] sm:$0xff]
        %v406 = vld [vmem:[%s327 + $0x38] sm:$0xff]
        %v407 = vld [vmem:[%s327 + $0x40] sm:$0xff]
        %v408 = vld [vmem:[%s327 + $0x48] sm:$0xff]
        %v409 = vld [vmem:[%s327 + $0x50] sm:$0xff]
        %v410 = vld [vmem:[%s327 + $0x58] sm:$0xff]
        %v411 = vld [vmem:[%s327 + $0x60] sm:$0xff]
        %v412 = vld [vmem:[%s327 + $0x68] sm:$0xff]
        %v413 = vld [vmem:[%s327 + $0x70] sm:$0xff]
        %v414 = vld [vmem:[%s327 + $0x78] sm:$0xff]
        %415 = vmatprep.subr.mxu0 0.0
        %416 = vmatpush1.xpose.msra.mxu0 %v399
        %417 = vmatprep.subr.mxu0 0.0
        %418 = vmatpush1.xpose.msra.mxu0 %v400
        %419 = vmatprep.subr.mxu0 0.0
        %420 = vmatpush1.xpose.msra.mxu0 %v401
        %421 = vmatprep.subr.mxu0 0.0
        %422 = vmatpush1.xpose.msra.mxu0 %v402
        %423 = vmatprep.subr.mxu0 0.0
        %424 = vmatpush1.xpose.msra.mxu0 %v403
        %425 = vmatprep.subr.mxu0 0.0
        %426 = vmatpush1.xpose.msra.mxu0 %v404
        %427 = vmatprep.subr.mxu0 0.0
        %428 = vmatpush1.xpose.msra.mxu0 %v405
        %429 = vmatprep.subr.mxu0 0.0
        %430 = vmatpush1.xpose.msra.mxu0 %v406
        %431 = vmatprep.subr.mxu0 0.0
        %432 = vmatpush1.xpose.msra.mxu0 %v407
        %433 = vmatprep.subr.mxu0 0.0
        %434 = vmatpush1.xpose.msra.mxu0 %v408
        %435 = vmatprep.subr.mxu0 0.0
        %436 = vmatpush1.xpose.msra.mxu0 %v409
        %437 = vmatprep.subr.mxu0 0.0
        %438 = vmatpush1.xpose.msra.mxu0 %v410
        %439 = vmatprep.subr.mxu0 0.0
        %440 = vmatpush1.xpose.msra.mxu0 %v411
        %441 = vmatprep.subr.mxu0 0.0
        %442 = vmatpush1.xpose.msra.mxu0 %v412
        %443 = vmatprep.subr.mxu0 0.0
        %444 = vmatpush1.xpose.msra.mxu0 %v413
        %445 = vmatprep.subr.mxu0 0.0
        %446 = vmatpush1.xpose.msra.mxu0 %v414
        %447 = vmatprep.subr.mxu0 0.0
        %448 = vmatpush1.xpose.msra.mxu0 0.0
        %449 = vmatprep.subr.mxu0 0.0
        %450 = vmatpush1.xpose.msra.mxu0 0.0
        %451 = vmatprep.subr.mxu0 0.0
        %452 = vmatpush1.xpose.msra.mxu0 0.0
        %453 = vmatprep.subr.mxu0 0.0
        %454 = vmatpush1.xpose.msra.mxu0 0.0
        %455 = vmatprep.subr.mxu0 0.0
        %456 = vmatpush1.xpose.msra.mxu0 0.0
        %457 = vmatprep.subr.mxu0 0.0
        %458 = vmatpush1.xpose.msra.mxu0 0.0
        %459 = vmatprep.subr.mxu0 0.0
        %460 = vmatpush1.xpose.msra.mxu0 0.0
        %461 = vmatprep.subr.mxu0 0.0
        %462 = vmatpush1.xpose.msra.mxu0 0.0
        %463 = vmatprep.subr.mxu0 0.0
        %464 = vmatpush1.xpose.msra.mxu0 0.0
        %465 = vmatprep.subr.mxu0 0.0
        %466 = vmatpush1.xpose.msra.mxu0 0.0
        %467 = vmatprep.subr.mxu0 0.0
        %468 = vmatpush1.xpose.msra.mxu0 0.0
        %469 = vmatprep.subr.mxu0 0.0
        %470 = vmatpush1.xpose.msra.mxu0 0.0
        %471 = vmatprep.subr.mxu0 0.0
        %472 = vmatpush1.xpose.msra.mxu0 0.0
        %473 = vmatprep.subr.mxu0 0.0
        %474 = vmatpush1.xpose.msra.mxu0 0.0
        %475 = vmatprep.subr.mxu0 0.0
        %476 = vmatpush1.xpose.msra.mxu0 0.0
        %477 = vmatprep.subr.mxu0 0.0
        %478 = vmatpush1.xpose.msra.mxu0 0.0
        %479 = vmatprep.mubr.f32.mxu0 0.0
        %480 = vmatmul.mubr.f32.gmra.mrb[0].mxu0 %v397
        %v481 = vpop.f32.mrb[0].mxu0
        %v482 = vadd.f32 0.0, %v481
        %v483 = vpop.f32.mrb[0].mxu0
        %484 = vdwg.mxu0
        %v485 = vadd.f32 %v398, %v482
        %486 = vst [vmem:[#allocation2] sm:$0xff] %v485
        %v487 = vld [vmem:[#allocation3] sm:$0xff]
        %v488 = vld [vmem:[%s336] sm:$0xff]
        %v489 = vld [vmem:[%s336 + $0x8] sm:$0xff]
        %v490 = vld [vmem:[%s336 + $0x10] sm:$0xff]
        %v491 = vld [vmem:[%s336 + $0x18] sm:$0xff]
        %v492 = vld [vmem:[%s336 + $0x20] sm:$0xff]
        %v493 = vld [vmem:[%s336 + $0x28] sm:$0xff]
        %v494 = vld [vmem:[%s336 + $0x30] sm:$0xff]
        %v495 = vld [vmem:[%s336 + $0x38] sm:$0xff]
        %v496 = vld [vmem:[%s336 + $0x40] sm:$0xff]
        %v497 = vld [vmem:[%s336 + $0x48] sm:$0xff]
        %v498 = vld [vmem:[%s336 + $0x50] sm:$0xff]
        %v499 = vld [vmem:[%s336 + $0x58] sm:$0xff]
        %v500 = vld [vmem:[%s336 + $0x60] sm:$0xff]
        %v501 = vld [vmem:[%s336 + $0x68] sm:$0xff]
        %v502 = vld [vmem:[%s336 + $0x70] sm:$0xff]
        %v503 = vld [vmem:[%s336 + $0x78] sm:$0xff]
        %504 = vmatprep.subr.mxu0 0.0
        %505 = vmatpush1.xpose.msra.mxu0 %v488
        %506 = vmatprep.subr.mxu0 0.0
        %507 = vmatpush1.xpose.msra.mxu0 %v489
        %508 = vmatprep.subr.mxu0 0.0
        %509 = vmatpush1.xpose.msra.mxu0 %v490
        %510 = vmatprep.subr.mxu0 0.0
        %511 = vmatpush1.xpose.msra.mxu0 %v491
        %512 = vmatprep.subr.mxu0 0.0
        %513 = vmatpush1.xpose.msra.mxu0 %v492
        %514 = vmatprep.subr.mxu0 0.0
        %515 = vmatpush1.xpose.msra.mxu0 %v493
        %516 = vmatprep.subr.mxu0 0.0
        %517 = vmatpush1.xpose.msra.mxu0 %v494
        %518 = vmatprep.subr.mxu0 0.0
        %519 = vmatpush1.xpose.msra.mxu0 %v495
        %520 = vmatprep.subr.mxu0 0.0
        %521 = vmatpush1.xpose.msra.mxu0 %v496
        %522 = vmatprep.subr.mxu0 0.0
        %523 = vmatpush1.xpose.msra.mxu0 %v497
        %524 = vmatprep.subr.mxu0 0.0
        %525 = vmatpush1.xpose.msra.mxu0 %v498
        %526 = vmatprep.subr.mxu0 0.0
        %527 = vmatpush1.xpose.msra.mxu0 %v499
        %528 = vmatprep.subr.mxu0 0.0
        %529 = vmatpush1.xpose.msra.mxu0 %v500
        %530 = vmatprep.subr.mxu0 0.0
        %531 = vmatpush1.xpose.msra.mxu0 %v501
        %532 = vmatprep.subr.mxu0 0.0
        %533 = vmatpush1.xpose.msra.mxu0 %v502
        %534 = vmatprep.subr.mxu0 0.0
        %535 = vmatpush1.xpose.msra.mxu0 %v503
        %536 = vmatprep.subr.mxu0 0.0
        %537 = vmatpush1.xpose.msra.mxu0 0.0
        %538 = vmatprep.subr.mxu0 0.0
        %539 = vmatpush1.xpose.msra.mxu0 0.0
        %540 = vmatprep.subr.mxu0 0.0
        %541 = vmatpush1.xpose.msra.mxu0 0.0
        %542 = vmatprep.subr.mxu0 0.0
        %543 = vmatpush1.xpose.msra.mxu0 0.0
        %544 = vmatprep.subr.mxu0 0.0
        %545 = vmatpush1.xpose.msra.mxu0 0.0
        %546 = vmatprep.subr.mxu0 0.0
        %547 = vmatpush1.xpose.msra.mxu0 0.0
        %548 = vmatprep.subr.mxu0 0.0
        %549 = vmatpush1.xpose.msra.mxu0 0.0
        %550 = vmatprep.subr.mxu0 0.0
        %551 = vmatpush1.xpose.msra.mxu0 0.0
        %552 = vmatprep.subr.mxu0 0.0
        %553 = vmatpush1.xpose.msra.mxu0 0.0
        %554 = vmatprep.subr.mxu0 0.0
        %555 = vmatpush1.xpose.msra.mxu0 0.0
        %556 = vmatprep.subr.mxu0 0.0
        %557 = vmatpush1.xpose.msra.mxu0 0.0
        %558 = vmatprep.subr.mxu0 0.0
        %559 = vmatpush1.xpose.msra.mxu0 0.0
        %560 = vmatprep.subr.mxu0 0.0
        %561 = vmatpush1.xpose.msra.mxu0 0.0
        %562 = vmatprep.subr.mxu0 0.0
        %563 = vmatpush1.xpose.msra.mxu0 0.0
        %564 = vmatprep.subr.mxu0 0.0
        %565 = vmatpush1.xpose.msra.mxu0 0.0
        %566 = vmatprep.subr.mxu0 0.0
        %567 = vmatpush1.xpose.msra.mxu0 0.0
        %568 = vmatprep.mubr.f32.mxu0 0.0
        %569 = vmatmul.mubr.f32.gmra.mrb[0].mxu0 %v397
        %v570 = vpop.f32.mrb[0].mxu0
        %v571 = vadd.f32 0.0, %v570
        %v572 = vpop.f32.mrb[0].mxu0
        %573 = vdwg.mxu0
        %v574 = vadd.f32 %v487, %v571
        %575 = vst [vmem:[#allocation3] sm:$0xff] %v574
        %p576 = scmp.eq.s32.totalorder %s32, 1
        // Predicated region
        $region57: #{tpu_custom_call.1} parent=39 // pred_check
          %p577 = pneg %p576
        $region58: #{tpu_custom_call.1} parent=39 // pred_check_branch
          %579 = sbr.rel (%p577) target = $region60
        $region59: #{tpu_custom_call.1} parent=39 // pred_region
          %v580 = vld [vmem:[#allocation2] sm:$0xff]
          %v581 = vld [vmem:[%s385] sm:$0x1]
          %v583 = vlaneseq
          %v584 = vshrl.u32 %v583, 7
          %v585 = vsub.s32 0, %v584
          %v586 = vrot.slane %v581, %v585
          %v588 = vadd.f32 %v580, %v586
          %v589 = vld [vmem:[#allocation3] sm:$0xff]
          %v590 = vld [vmem:[%s389] sm:$0x1]
          %v592 = vlaneseq
          %v593 = vshrl.u32 %v592, 7
          %v594 = vsub.s32 0, %v593
          %v595 = vrot.slane %v590, %v594
          %v597 = vadd.f32 %v589, %v595
          %v598 = vxor.u32 %v597, 2147483648
          %v599 = vmul.f32 %v598, 1.442695
          %v600 = vpow.pop %v599
          %v601 = vadd.f32 %v600, 1.0
          %v602 = vrcp.pop %v601
          %v603 = vmul.f32 1.0, %v602
          %v604 = vmul.f32 %v588, %v603
          %605 = vst [vmem:[%s379] sm:$0xff] %v604
        $region60: #{tpu_custom_call.1} parent=39 // pred_fallthru
          _
        %s606 = sand.u32 %s194, 1
        %s607 = scalar_lea.sflag [#allocation6], %s606
        %s608 = sand.u32 %s194, 1
        %s609 = smul.addr %s608, 8
        %s610 = scalar_lea.vmem [#allocation10], %s609
        // Predicated region
        $region61: #{tpu_custom_call.1} parent=39 // pred_check
          %p611 = pneg %p204
        $region62: #{tpu_custom_call.1} parent=39 // pred_check_branch
          %613 = sbr.rel (%p611) target = $region64
        $region63: #{tpu_custom_call.1} parent=39 // pred_region
          %s615 = ssub.s32 128, 128
          %616 = vsyncadd %s607, %s615
          %s617 = smul.addr %s30, 2
          %s618 = sadd.s32 %s31, %s617
          %s619 = smul.addr %s618, 128
          %s620 = scalar_lea.hbm %s5, %s619
          %s622 = sshll.u32 %s610, 4
          %s623 = int_to_ptr.vmem [resolvable:$true] %s622
          %625 = dma.vmem_to_hbm [thread:$0]  %s623, 128, %s620, %s607
        $region64: #{tpu_custom_call.1} parent=39 // pred_fallthru
          _
      $region40: #{tpu_custom_call.1} parent=5 // pred_fallthru
        _
      %p626 = scmp.le.s32.totalorder 2, %s20
      // Predicated region
      $region65: #{tpu_custom_call.1} parent=5 // pred_check
        %p627 = pneg %p626
      $region66: #{tpu_custom_call.1} parent=5 // pred_check_branch
        %629 = sbr.rel (%p627) target = $region68
      $region67: #{tpu_custom_call.1} parent=5 // pred_region
        %s630 = ssub.s32 %s20, 2
        // Predicated region
        $region69: #{tpu_custom_call.1} parent=67 // pred_check
          %p631 = pneg %p210
        $region70: #{tpu_custom_call.1} parent=67 // pred_check_branch
          %633 = sbr.rel (%p631) target = $region72
        $region71: #{tpu_custom_call.1} parent=67 // pred_region
          %s634 = sand.u32 %s195, 1
          %s635 = scalar_lea.sflag [#allocation6], %s634
          %s636 = sand.u32 %s195, 1
          %s637 = smul.addr %s636, 8
          %s638 = scalar_lea.vmem [#allocation10], %s637
          %639 = dma.done %s635, 128
        $region72: #{tpu_custom_call.1} parent=67 // pred_fallthru
          _
      $region68: #{tpu_custom_call.1} parent=5 // pred_fallthru
        _
    $region6: #{tpu_custom_call.1} parent=1 // loop_footer
      %s24 = sadd.s32 1, %s20
    $region7: #{tpu_custom_call.1} parent=1 // loop_footer_branch
      %19 = sbr.rel target = $region3
    $region8: #{tpu_custom_call.1} parent=1 // loop_exit
      _
    %640 = vsyncpa [#allocation5], 1
    %s641 = scalar_lea.sflag [#allocation5], 1
    %642 = vsyncpa %s641, 1
    %643 = vsyncpa [#allocation8], 1
    %s644 = scalar_lea.sflag [#allocation8], 1
    %645 = vsyncpa %s644, 1
    %646 = vsyncpa [#allocation6], 1
    %s647 = scalar_lea.sflag [#allocation6], 1
    %648 = vsyncpa %s647, 1

</llo_original>
